<compile_context>
chip_gen: v7x
topology: tpu7x:2x2x1
jax: 0.10.0
libtpu: 0.0.40
codegen_flags: <defaults>
</compile_context>

<pallas_src>
import math
import functools

import numpy as np
import jax
import jax.numpy as jnp
from jax import lax
from jax.experimental import pallas as pl
from jax.experimental.pallas import tpu as pltpu

DIRECTIONNUM = 8
LINEDIVISOR = 25
AVOID_ADD = 0.001
GRAD_THRESHOLD = 0.015
_NPAR = 8  # partial accumulators; sweep 4..8 on HW now that rolls are deduped


def _round_up(x, m):
    return ((x + m - 1) // m) * m


def make_line_kernels(H, W):
    """Reproduces PencilDraw.get_line's directional line kernels (trace-time constants)."""
    ks = min(H, W) // LINEDIVISOR
    ks += int(ks % 2 == 0)  # force odd, like `kernel_size += kernel_size % 2 == 0`
    half = ks / 2
    kern = np.zeros((DIRECTIONNUM, ks, ks), dtype=np.float32)
    for i in range(DIRECTIONNUM):
        if i != DIRECTIONNUM // 2 and abs(math.tan(math.pi / DIRECTIONNUM * i)) <= 1:
            d = math.tan(math.pi / DIRECTIONNUM * i)
            for x in range(ks):
                y = int(d * (x - half) + half)
                if 0 <= y < ks:
                    kern[i, y, x] = 1.0
        else:
            d = 1.0 / math.tan(math.pi / DIRECTIONNUM * i)
            for y in range(ks):
                x = int(d * (y - half) + half)
                if 0 <= x < ks:
                    kern[i, y, x] = 1.0
    return kern, ks


# ---------------------------------------------------------------------------
# Tiny probe that pins pltpu.roll's rotation convention on the actual backend,
# so the shift math below is direction-safe (cached, runs once).
# ---------------------------------------------------------------------------
def _roll_probe_kernel(x_ref, o_ref):
    o_ref[...] = pltpu.roll(x_ref[...], 1, axis=1)


@functools.lru_cache(maxsize=None)
def _roll_is_numpy_convention():
    """True iff pltpu.roll(x, s, axis)[i] == x[(i - s) % n] (np.roll semantics)."""
    x = jnp.broadcast_to(jnp.arange(128, dtype=jnp.float32)[None, :], (8, 128))
    y = pl.pallas_call(
        _roll_probe_kernel,
        out_shape=jax.ShapeDtypeStruct((8, 128), jnp.float32),
    )(x)
    return bool(float(y[0, 0]) == 127.0)


def _bounded_sum(terms, n_par=_NPAR):
    """Sum an iterable of arrays keeping at most `n_par` live partial accumulators."""
    parts = []
    for i, t in enumerate(terms):
        if len(parts) < n_par:
            parts.append(t)
        else:
            parts[i % n_par] = parts[i % n_par] + t
    while len(parts) > 1:  # final tree reduction of the partials
        nxt = [parts[j] + parts[j + 1] for j in range(0, len(parts) - 1, 2)]
        if len(parts) % 2:
            nxt.append(parts[-1])
        parts = nxt
    return parts[0] if parts else None


# ---------------------------------------------------------------------------
# Pass A: gradient -> directional line convs (fused argmax) -> spread -> raw Sp
# Row-tiled: each grid step handles bh logical rows with a 2p(+)-row halo.
# ---------------------------------------------------------------------------
def _line_pass_kernel(img_ref, sp_ref, *, taps, H, W, A, bh, p, roll_np):
    t = pl.program_id(0)
    Wp = img_ref.shape[1]
    HL = bh + 2 * A

    base = pl.multiple_of(t * bh, 8)
    img = img_ref[pl.ds(base, HL), :]                     # (HL, Wp) halo'd window

    # (HL,1)/(1,Wp) iotas only (no full int32 planes)
    jrow = lax.broadcasted_iota(jnp.int32, (HL, 1), 0)
    col = lax.broadcasted_iota(jnp.int32, (1, Wp), 1)

    def lshift(x, ox):
        # out[:, i] = x[:, (i + ox) % Wp]; wrap lands in the zero column apron
        if ox == 0:
            return x
        amt = (-ox) % Wp if roll_np else ox % Wp
        return pltpu.roll(x, amt, axis=1)

    def rshift(x, oy):
        # out[j, :] = x[(j + oy) % HL, :]; wrap only contaminates halo rows that
        # are never consumed (A >= 2p + 1, output rows are [A, A+bh)).
        if oy == 0:
            return x
        amt = (-oy) % HL if roll_np else oy % HL
        return pltpu.roll(x, amt, axis=0)

    # ---- gradient magnitude (forward diffs; trailing edge zero, like torch.cat) ----
    lo = A - t * bh                 # local row of logical row 0
    hi = lo + (H - 1)               # local row of logical row H-1 (dy forced to 0 there)
    right = lshift(img, 1)
    down = rshift(img, 1)
    dx = jnp.where(col < (W - 1), img - right, 0.0)
    dy = jnp.where((jrow >= lo) & (jrow < hi), img - down, 0.0)
    d = jnp.sqrt(dx * dx + dy * dy)
    d = jnp.where(d < GRAD_THRESHOLD, 0.0, d)
    # d == 0 on every apron row/col, so circular rolls reproduce zero padding exactly.

    def conv_dir(cache, dir_taps):
        # sum over taps of shifted planes; all line-kernel taps are exactly 1.0 so
        # only adds are emitted; taps sharing a row offset share one sublane roll.
        by_row = {}
        for oy, ox in dir_taps:
            by_row.setdefault(oy, []).append(ox)

        def terms():
            for oy in sorted(by_row):
                s = _bounded_sum(cache[ox] for ox in sorted(by_row[oy]))
                yield rshift(s, oy)

        out = _bounded_sum(terms())
        return out if out is not None else jnp.zeros_like(d)

    # ---- pass 1: directional responses, argmax fused.  The 2p+1 lane-shifted planes
    #      of d are cached ONCE and shared by all 8 directions (ext-slot dedupe). ----
    all_ox = sorted({ox for dt in taps for (_, ox) in dt})
    dcache = {ox: lshift(d, ox) for ox in all_ox}
    g_max = conv_dir(dcache, taps[0])
    g_idx = jnp.zeros((HL, Wp), jnp.int32)
    for n in range(1, DIRECTIONNUM):
        g_n = conv_dir(dcache, taps[n])
        g_idx = jnp.where(g_n > g_max, jnp.int32(n), g_idx)  # first-max tie break
        g_max = jnp.maximum(g_max, g_n)

    # ---- pass 2: classify gradients per direction, spread with the same kernel ----
    sp_parts = []
    for n in range(DIRECTIONNUM):
        c_n = jnp.where(g_idx == n, d, 0.0)
        oxs = sorted({ox for (_, ox) in taps[n]})           # per-direction lane dedupe
        ccache = {ox: lshift(c_n, ox) for ox in oxs}
        contrib = conv_dir(ccache, taps[n])
        if len(sp_parts) < 2:
            sp_parts.append(contrib)
        else:
            sp_parts[n % 2] = sp_parts[n % 2] + contrib
    sp = sp_parts[0] if len(sp_parts) == 1 else sp_parts[0] + sp_parts[1]

    # keep only this tile's bh output rows (halo discarded); A is a multiple of 8
    sp_ref[...] = sp[A:A + bh, :]


# ---------------------------------------------------------------------------
# Pass B: normalize Sp with the global min / 1/range, gamma, tone * line.
# texture/weight are only touched here (freed from the conv-phase VMEM budget).
# ---------------------------------------------------------------------------
def _tone_line_kernel(mm_ref, sp_ref, tex_ref, wgt_ref, s_ref, *, gammaS):
    sp_min = mm_ref[0]
    inv = mm_ref[1]
    spn = (sp_ref[...] - sp_min) * inv
    one_minus = 1.0 - spn
    if gammaS == 1.0:
        line = one_minus
    else:
        # torch: (1 - Sp) ** gammaS with pow(0, g) == 0 exactly at the max pixel
        line = jnp.where(one_minus <= 0.0, 0.0,
                         jnp.exp(gammaS * jnp.log(jnp.maximum(one_minus, 1e-30))))
    # TextureLearn.forward(): texture ** weight - avoid_add (texture > 0, as in torch)
    tone = jnp.exp(wgt_ref[...] * jnp.log(tex_ref[...])) - AVOID_ADD
    s_ref[...] = (tone * line).astype(s_ref.dtype)


def _vmem_capacity_bytes():
    try:
        return int(pltpu.get_tpu_info().vmem_capacity_bytes)
    except Exception:
        return 64 << 20  # conservative (v7x-sized) fallback


def _pick_tile_rows(H, A, Wp, ks, vmem_cap):
    """Largest row tile whose ~(ks + 12) live f32 planes fit in ~40% of VMEM."""
    budget = int(vmem_cap * 0.40)
    per_row = (ks + 12) * Wp * 4
    hl = max(budget // max(per_row, 1), 2 * A + 8)
    bh = _round_up(max(hl - 2 * A, 8), 8)
    return int(min(bh, 1024))


def pencil_draw(img_gray, texture, weight, gammaS=1.0, tile_rows=None):
    """img_gray / texture / weight: (1, H, W) float32 (torch CHW, single channel).

    Returns S = tone * line, shape (1, H, W), matching PencilDraw.forward's S.
    """
    C, H, W = img_gray.shape
    assert C == 1
    kernels, ks = make_line_kernels(H, W)
    p = ks // 2

    # Tap offsets (relative to the kernel centre) of the 0/1 line kernels.
    taps = tuple(
        tuple((ky - p, kx - p)
              for ky in range(ks) for kx in range(ks) if kernels[n, ky, kx] != 0.0)
        for n in range(DIRECTIONNUM)
    )

    A = _round_up(2 * p + 1, 8)            # row halo: conv-of-conv radius + grad row
    Wp = max(_round_up(W + p, 128), 128)   # lane-dense width with >= p zero col apron

    vmem_cap = _vmem_capacity_bytes()
    if tile_rows is None:
        tile_rows = _pick_tile_rows(H, A, Wp, ks, vmem_cap)
    bh = max(8, _round_up(min(int(tile_rows), _round_up(H, 8)), 8))
    T = (H + bh - 1) // bh
    Hb = T * bh                            # output rows (logical rows [0, H) valid)
    Hp = Hb + 2 * A                        # padded input rows (image lives at [A, A+H))
    HL = bh + 2 * A                        # per-tile working window height

    img_p = jnp.pad(img_gray[0].astype(jnp.float32),
                    ((A, Hp - A - H), (0, Wp - W)))
    tex_p = jnp.pad(texture[0].astype(jnp.float32),
                    ((0, Hb - H), (0, Wp - W)), constant_values=1.0)  # log stays finite
    wgt_p = jnp.pad(weight[0].astype(jnp.float32),
                    ((0, Hb - H), (0, Wp - W)))

    roll_np = _roll_is_numpy_convention()

    # ---- pass A: unnormalized Sp, row-tiled, megacore-parallel ------------------
    n_taps = sum(len(dt) for dt in taps)
    cost_a = pl.CostEstimate(
        flops=int((4 * n_taps + 40) * Hb * Wp),
        transcendentals=int(2 * Hb * Wp),
        bytes_accessed=int(4 * (Hp * Wp + Hb * Wp)),
    )
    plane = HL * Wp * 4
    est_a = 2 * Hp * Wp * 4 + 2 * bh * Wp * 4 + (ks + 12) * plane
    vmem_a = int(min(max(int(est_a * 1.5), 32 << 20), vmem_cap - (8 << 20)))

    kern_a = functools.partial(_line_pass_kernel, taps=taps, H=H, W=W, A=A,
                               bh=bh, p=p, roll_np=roll_np)
    sp = pl.pallas_call(
        kern_a,
        out_shape=jax.ShapeDtypeStruct((Hb, Wp), jnp.float32),
        grid=(T,),
        in_specs=[pl.BlockSpec((Hp, Wp), lambda t: (0, 0))],   # image resident once
        out_specs=pl.BlockSpec((bh, Wp), lambda t: (t, 0)),    # lane-dense row tiles
        compiler_params=pltpu.CompilerParams(
            dimension_semantics=("parallel",),   # v7x: row tiles split across 2 TCs
            vmem_limit_bytes=vmem_a),
        cost_estimate=cost_a,
    )(img_p)

    # ---- global min/max (two-pass normalization; tiny XLA reduction) -----------
    sp_valid = sp[:H, :W]
    sp_min = jnp.min(sp_valid)
    sp_max = jnp.max(sp_valid)
    # scalar reciprocal; the epsilon only changes the degenerate flat-image case
    # (where torch would NaN).
    inv = 1.0 / jnp.maximum(sp_max - sp_min, 1e-12)
    mm = jnp.stack([sp_min, inv]).astype(jnp.float32)

    # ---- pass B: normalize + gamma + tone * line (elementwise, row tiled) ------
    spec_t = pl.BlockSpec((bh, Wp), lambda t: (t, 0))
    vmem_b = int(min(max(10 * bh * Wp * 4, 16 << 20), vmem_cap - (8 << 20)))
    kern_b = functools.partial(_tone_line_kernel, gammaS=float(gammaS))
    s2d = pl.pallas_call(
        kern_b,
        out_shape=jax.ShapeDtypeStruct((Hb, Wp), jnp.float32),
        grid=(T,),
        in_specs=[pl.BlockSpec(memory_space=pltpu.MemorySpace.SMEM),  # [min, 1/range]
                  spec_t, spec_t, spec_t],
        out_specs=spec_t,
        compiler_params=pltpu.CompilerParams(
            dimension_semantics=("parallel",),
            vmem_limit_bytes=vmem_b),
    )(mm, sp, tex_p, wgt_p)

    return s2d[:H, :W][None]


# ---------------------------------------------------------------------------
# Pure-JAX reference (independent implementation via lax.conv) for validation.
# ---------------------------------------------------------------------------
def pencil_reference(img_gray, texture, weight, gammaS=1.0):
    C, H, W = img_gray.shape
    kernels, ks = make_line_kernels(H, W)
    p = ks // 2
    x = img_gray[0]
    dx = jnp.concatenate([x[:, :-1] - x[:, 1:], jnp.zeros((H, 1), x.dtype)], axis=1)
    dy = jnp.concatenate([x[:-1, :] - x[1:, :], jnp.zeros((1, W), x.dtype)], axis=0)
    d = jnp.sqrt(dx * dx + dy * dy)
    d = jnp.where(d < GRAD_THRESHOLD, 0.0, d)
    k = jnp.asarray(kernels)                                    # (8, ks, ks)
    G = lax.conv_general_dilated(
        d[None, None], k[:, None], window_strides=(1, 1), padding=[(p, p), (p, p)],
        dimension_numbers=("NCHW", "OIHW", "NCHW"),
        precision=lax.Precision.HIGHEST)[0]                     # (8, H, W)
    g_idx = jnp.argmax(G, axis=0)
    cmap = jnp.where(g_idx[None] == jnp.arange(DIRECTIONNUM)[:, None, None],
                     d[None], 0.0)                              # (8, H, W)
    spn = lax.conv_general_dilated(
        cmap[None], k[:, None], window_strides=(1, 1), padding=[(p, p), (p, p)],
        dimension_numbers=("NCHW", "OIHW", "NCHW"),
        feature_group_count=DIRECTIONNUM,
        precision=lax.Precision.HIGHEST)[0]                     # (8, H, W)
    sp = spn.sum(0)
    sp = (sp - sp.min()) / (sp.max() - sp.min())
    line = (1.0 - sp) ** gammaS
    tone = texture[0] ** weight[0] - AVOID_ADD
    return (tone * line)[None]


if __name__ == "__main__":
    # TODO(synk): PIL open/resize/SMOOTH, cv2 CLAHE, match_histo and the TextureLearn
    # Adam training loop have no Pallas equivalent; deterministic arrays below stand in
    # for the preprocessed grayscale image, the texture image, and the learned weight.
    key = jax.random.PRNGKey(0)
    k_img, k_tex, k_wgt = jax.random.split(key, 3)
    H = W = 120  # kernel_size = 120 // 25 = 4 -> 5 (odd), p = 2
    img_gray = jax.random.uniform(k_img, (1, H, W), jnp.float32)             # ToTensor in [0,1]
    texture = jax.random.uniform(k_tex, (1, H, W), jnp.float32, 0.05, 1.0)   # texture image, > 0
    weight = jnp.abs(jax.random.normal(k_wgt, (1, H, W), jnp.float32))       # abs(randn)

    # tile_rows=64 -> 2 row tiles, exercising the halo'd tiled path.
    s = pencil_draw(img_gray, texture, weight, gammaS=1.0, tile_rows=64)
    s = jax.block_until_ready(s)
    assert s.shape == (1, H, W) and bool(jnp.all(jnp.isfinite(s)))

    s_want = pencil_reference(img_gray, texture, weight, gammaS=1.0)
    err = float(jnp.max(jnp.abs(s - s_want)))
    assert err < 2e-3, f"kernel/reference mismatch: max abs err = {err}"
    print("KERNEL_OK")
</pallas_src>

<mosaic_0001>
module attributes {stable_mosaic.version = 11 : i64} {
  func.func @_roll_probe_kernel(%arg0: memref<8x128xf32, #tpu.memory_space<vmem>>, %arg1: memref<8x128xf32, #tpu.memory_space<vmem>>) attributes {dimension_semantics = [], scalar_prefetch = 0 : i64, scratch_operands = 0 : i64, tpu.core_type = #tpu.core_type<tc>} {
    %c0 = arith.constant 0 : index
    %c0_0 = arith.constant 0 : index
    %0 = vector.load %arg0[%c0, %c0_0] : memref<8x128xf32, #tpu.memory_space<vmem>>, vector<8x128xf32>
    %c1_i32 = arith.constant 1 : i32
    %1 = tpu.dynamic_rotate %0 by %c1_i32 dim 1 : vector<8x128xf32>, i32 -> vector<8x128xf32>
    %c0_1 = arith.constant 0 : index
    %c0_2 = arith.constant 0 : index
    %2 = vector.load %arg1[%c0_1, %c0_2] : memref<8x128xf32, #tpu.memory_space<vmem>>, vector<8x128xf32>
    tpu.vector_store %arg1[%c0_1, %c0_2], %1 {strides = array<i32>} : memref<8x128xf32, #tpu.memory_space<vmem>>, vector<8x128xf32>,
    return
  }
}

</mosaic_0001>

<llo_original>
// kernel: tpu_custom_call.1
$region0: #{tpu_custom_call.1}
  #allocation0 [shape = 'u32[]', space=smem, size = 0x4, offset = 0x4, fixed_abs, tag = 'smem constant byte address 0x4 - core index']
  #allocation1 [shape = 'u32[144,128]{1,0:T(1,128)}', space=vmem, size = 0x12000, scoped, tag = 'internal scratch']
  %s0 = inlined_call_operand.hbm [shape: f32[8,128], index: 0, kind: input, shape index: {}]
  %s1 = inlined_call_operand.hbm [shape: f32[8,128], index: 1, kind: output, shape index: {}]
  %s2 = sld [smem:[#allocation0]]
  $region18: #{tpu_custom_call.1} parent=0
    _
  %s4 = ssub.s32 1, %s2
  %s5 = scalar_select 0, %s4, %s2
  $region1: #{tpu_custom_call.1} parent=0
    #allocation2 [shape = 'u8[4096]{0}', space=vmem, size = 0x1000, scoped, tag = 'input window, operand 0, single buffered']
    #allocation3 [shape = 's32[1]{0}', space=sflag, size = 0x4, scoped, tag = 'scoped memory for tpu_custom_call.1']
    #allocation4 [shape = 's32[1]{0}', space=sflag, size = 0x4, scoped, tag = 'scoped memory for tpu_custom_call.1']
    #allocation5 [shape = 'u8[4096]{0}', space=vmem, size = 0x1000, scoped, tag = 'output window, operand 0, single buffered']
    %6 = vsyncpa [#allocation3], 0
    %7 = vsyncpa [#allocation4], 0
    // Predicated region
    $region2: #{tpu_custom_call.1} parent=1 // pred_check
      _
    $region3: #{tpu_custom_call.1} parent=1 // pred_check_branch
      %9 = sbr.rel (0) target = $region5
    $region4: #{tpu_custom_call.1} parent=1 // pred_region
      %s11 = ssub.s32 128, 128
      %12 = vsyncadd [#allocation3], %s11
      %s14 = sshll.u32 [#allocation2], 4
      %s15 = int_to_ptr.vmem [resolvable:$true] %s14
      %17 = dma.hbm_to_vmem [thread:$0]  %s0, 128, %s15, [#allocation3]
    $region5: #{tpu_custom_call.1} parent=1 // pred_fallthru
      _
    // Predicated region
    $region6: #{tpu_custom_call.1} parent=1 // pred_check
      _
    $region7: #{tpu_custom_call.1} parent=1 // pred_check_branch
      %19 = sbr.rel (0) target = $region9
    $region8: #{tpu_custom_call.1} parent=1 // pred_region
      %20 = dma.done [#allocation3], 128
    $region9: #{tpu_custom_call.1} parent=1 // pred_fallthru
      _
    %v21 = vld [vmem:[#allocation2] sm:$0xff]
    %22 = vrot.lane.b32.xlu0 %v21, 1
    %v23 = vpop.permute.xlu0 %22
    %24 = vst [vmem:[#allocation5] sm:$0xff] %v23
    // Predicated region
    $region10: #{tpu_custom_call.1} parent=1 // pred_check
      _
    $region11: #{tpu_custom_call.1} parent=1 // pred_check_branch
      %26 = sbr.rel (0) target = $region13
    $region12: #{tpu_custom_call.1} parent=1 // pred_region
      %s28 = ssub.s32 128, 128
      %29 = vsyncadd [#allocation4], %s28
      %s31 = sshll.u32 [#allocation5], 4
      %s32 = int_to_ptr.vmem [resolvable:$true] %s31
      %34 = dma.vmem_to_hbm [thread:$0]  %s32, 128, %s1, [#allocation4]
    $region13: #{tpu_custom_call.1} parent=1 // pred_fallthru
      _
    // Predicated region
    $region14: #{tpu_custom_call.1} parent=1 // pred_check
      _
    $region15: #{tpu_custom_call.1} parent=1 // pred_check_branch
      %36 = sbr.rel (0) target = $region17
    $region16: #{tpu_custom_call.1} parent=1 // pred_region
      %37 = dma.done [#allocation4], 128
    $region17: #{tpu_custom_call.1} parent=1 // pred_fallthru
      _
    %38 = vsyncpa [#allocation3], 1
    %39 = vsyncpa [#allocation4], 1

</llo_original>
